<compile_context>
chip_gen: v6e
topology: v6e:2x2x1
jax: 0.10.0
libtpu: 0.0.40
codegen_flags: <defaults>
</compile_context>

<pallas_src>
import jax
import jax.numpy as jnp
from jax import lax
from jax.experimental import pallas as pl
from jax.experimental.pallas import tpu as pltpu

# small shapes consistent with the module (hidden=32, mid_linear_dims=128,
# max_seq_len=8, num_tags=2, batch=2)
B, L, H, MID, NUM_TAGS = 2, 8, 32, 128, 2
LANE = 128           # lane-padded width of the packed output slab
EPS = 0.1            # label-smoothing epsilon (LabelSmoothingCrossEntropy)

# packed-output column layout
_LOGITS = 0
_PROB = NUM_TAGS
_LOGP = 2 * NUM_TAGS
_PRED = 3 * NUM_TAGS
_LOSS = 3 * NUM_TAGS + 1
_USED = 3 * NUM_TAGS + 2


def classify_head_kernel(labels_ref, x_ref, mask_ref, w1b_ref, w2t_ref, out_ref):
    # replace_masked_values(seq_out, attention_masks.unsqueeze(-1), 0)
    # x pre-flattened to (B*L, H); mask is a (B*L, 1) column -> lane broadcast.
    x = x_ref[...] * mask_ref[...]                               # (B*L, H) f32

    # packed params: rows [0:H]=w1, row H=b1, row H+1 lanes [0:NUM_TAGS]=b2
    w1b = w1b_ref[...]                                           # (H+2, MID)
    w1 = w1b[:H, :]                                              # (H, MID)
    b1 = w1b[H:H + 1, :]                                         # (1, MID)
    b2 = w1b[H + 1:H + 2, :NUM_TAGS]                             # (1, NUM_TAGS)

    # mid_linear: Linear(H, MID) -> ReLU (Dropout identity at inference), f32
    # inputs with f32 accumulation (matches PyTorch's f32 Linear).
    h = jnp.dot(x, w1, preferred_element_type=jnp.float32)
    h = jnp.maximum(h + b1, 0.0)                                 # (B*L, MID)

    # tags_fc: Linear(MID * L, NUM_TAGS) on the flattened mid_linear output.
    # Done on the VPU: logits[b,t] = sum_{l,m} h[b,l,m] * w2t[t,l,m] with w2
    # pre-packed as (NUM_TAGS, L, MID) -> no lane-crossing reshape, no MXU
    # weight reloads, no per-position sublane extracts.
    h3 = h.reshape(B, L, MID)                                    # leading split only
    w2t = w2t_ref[...]                                           # (NUM_TAGS, L, MID)
    per_pos = []
    for t in range(NUM_TAGS):                                    # unrolled, 2
        pt = h3 * w2t[t]                                         # (B, L, MID)
        per_pos.append(jnp.sum(pt, axis=-1, keepdims=True))      # (B, L, 1)
    pp = jnp.concatenate(per_pos, axis=-1)                       # (B, L, NUM_TAGS)
    logits = jnp.sum(pp, axis=1) + b2                            # (B, NUM_TAGS)

    # exact softmax / log_softmax (prob == exp(logp); exact row sums)
    m = jnp.max(logits, axis=-1, keepdims=True)
    z = logits - m
    e = jnp.exp(z)
    s = jnp.sum(e, axis=-1, keepdims=True)
    prob = e / s
    logp = z - jnp.log(s)

    # pred = torch.max(logits, 1).indices  (first max index on ties)
    col = lax.broadcasted_iota(jnp.int32, (B, NUM_TAGS), 1)
    is_max = logits == m
    pred_f = jnp.min(jnp.where(is_max, col.astype(jnp.float32), float(NUM_TAGS)),
                     axis=-1, keepdims=True)                     # (B, 1) f32

    # LabelSmoothingCrossEntropy(reduction='mean'), eps=EPS; labels from SMEM
    row = lax.broadcasted_iota(jnp.int32, (B, NUM_TAGS), 0)
    lab = jnp.zeros((B, NUM_TAGS), jnp.int32)
    for b in range(B):                                           # unrolled, 2
        lab = jnp.where(row == b, labels_ref[b], lab)
    onehot = col == lab
    nll = -jnp.sum(jnp.where(onehot, logp, 0.0), axis=-1, keepdims=True)
    smooth = -jnp.mean(logp, axis=-1, keepdims=True)
    per_ex = (1.0 - EPS) * nll + EPS * smooth                    # (B, 1)
    loss = jnp.mean(per_ex, axis=0, keepdims=True)               # (1, 1)

    # Assemble the lane-dense slab in registers; ONE unmasked full-width store.
    pad = jnp.zeros((B, LANE - _USED), jnp.float32)
    out_ref[...] = jnp.concatenate(
        [logits, prob, logp, pred_f, jnp.broadcast_to(loss, (B, 1)), pad],
        axis=-1)


@jax.jit
def classify_head(seq_out, attention_masks, labels, w1b, w2t):
    # Layout plumbing only (no compute hoisted): flatten activations, expand
    # the mask to a (B*L, 1) column, labels as 1-D int32 for SMEM.
    x2d = seq_out.reshape(B * L, H)
    mask2d = attention_masks.astype(jnp.float32).reshape(B * L, 1)
    labels1d = labels.astype(jnp.int32).reshape(B)

    vmem = pl.BlockSpec(memory_space=pltpu.MemorySpace.VMEM)
    smem = pl.BlockSpec(memory_space=pltpu.MemorySpace.SMEM)
    out = pl.pallas_call(
        classify_head_kernel,
        out_shape=jax.ShapeDtypeStruct((B, LANE), jnp.float32),
        in_specs=[smem, vmem, vmem, vmem, vmem],
        out_specs=vmem,
        cost_estimate=pl.CostEstimate(
            flops=150_000, transcendentals=8, bytes_accessed=30_000),
    )(labels1d, x2d, mask2d, w1b, w2t)

    logits = out[:, _LOGITS:_LOGITS + NUM_TAGS]
    prob = out[:, _PROB:_PROB + NUM_TAGS]
    pred = out[:, _PRED:_PRED + 1].astype(jnp.int32)             # (B, 1)
    loss = out[0, _LOSS]
    return logits, prob, pred, loss


def classify_model_forward(seq_out, attention_masks, labels, params):
    # mirrors ClassifyModel.forward (mode='null': metrics bookkeeping skipped)
    logits, prob, pred, loss = classify_head(
        seq_out, attention_masks, labels, params["w1b"], params["w2t"])
    return {"logits": logits, "loss": loss, "label": labels,
            "pred": pred, "prob": prob}


def pack_params(w1, b1, w2, b2):
    """Pack params once at init: b1/b2 rows into the w1 buffer, w2 transposed
    to (NUM_TAGS, L, MID) so the kernel needs no reshapes or extra DMAs."""
    b2_row = jnp.zeros((MID,), jnp.float32).at[:NUM_TAGS].set(b2)
    w1b = jnp.concatenate([w1, b1[None, :], b2_row[None, :]], axis=0)  # (H+2, MID)
    w2t = w2.reshape(L, MID, NUM_TAGS).transpose(2, 0, 1)              # (T, L, MID)
    return {"w1b": w1b, "w2t": w2t}


def init_raw_params(key):
    k1, k2 = jax.random.split(key)
    # _init_weights: Linear biases -> zeros; weights keep default init
    # (deterministic normal stands in for PyTorch's default kaiming-uniform)
    w1 = jax.random.normal(k1, (H, MID), jnp.float32) * 0.02
    b1 = jnp.zeros((MID,), jnp.float32)
    w2 = jax.random.normal(k2, (L * MID, NUM_TAGS), jnp.float32) * 0.02
    b2 = jnp.zeros((NUM_TAGS,), jnp.float32)
    return {"w1": w1, "b1": b1, "w2": w2, "b2": b2}


def reference_forward(seq_out, attention_masks, labels, w1, b1, w2, b2):
    """Pure-JAX reference of the PyTorch forward (f32, highest precision)."""
    x = seq_out * attention_masks[..., None]
    h = jax.nn.relu(
        jnp.dot(x.reshape(B * L, H), w1, precision=lax.Precision.HIGHEST) + b1)
    hf = h.reshape(B, L * MID)
    logits = jnp.dot(hf, w2, precision=lax.Precision.HIGHEST) + b2
    logp = jax.nn.log_softmax(logits, axis=-1)
    prob = jax.nn.softmax(logits, axis=-1)
    pred = jnp.argmax(logits, axis=-1)[:, None]
    nll = -jnp.take_along_axis(logp, labels[:, None], axis=-1)[:, 0]
    smooth = -jnp.mean(logp, axis=-1)
    loss = jnp.mean((1.0 - EPS) * nll + EPS * smooth)
    return logits, prob, pred, loss


if __name__ == "__main__":
    key = jax.random.PRNGKey(0)
    k_x, k_p, k_l = jax.random.split(key, 3)

    # stand-in for bert_outputs[0]: (B, L, H)
    seq_out = jax.random.normal(k_x, (B, L, H), jnp.float32)
    # attention mask with some padding in the second example
    attention_masks = jnp.array(
        [[1.0] * L, [1.0] * (L - 3) + [0.0] * 3], dtype=jnp.float32)
    labels = jax.random.randint(k_l, (B,), 0, NUM_TAGS)

    raw = init_raw_params(k_p)
    params = pack_params(raw["w1"], raw["b1"], raw["w2"], raw["b2"])

    out = classify_model_forward(seq_out, attention_masks, labels, params)
    jax.block_until_ready(out)

    logits_ref, prob_ref, pred_ref, loss_ref = reference_forward(
        seq_out, attention_masks, labels,
        raw["w1"], raw["b1"], raw["w2"], raw["b2"])

    assert out["logits"].shape == (B, NUM_TAGS)
    assert out["pred"].shape == (B, 1)
    assert out["prob"].shape == (B, NUM_TAGS)
    # exact softmax now: rows sum to 1 tightly
    assert bool(jnp.all(jnp.abs(jnp.sum(out["prob"], axis=-1) - 1.0) < 1e-5))
    assert bool(jnp.all((out["pred"] >= 0) & (out["pred"] < NUM_TAGS)))
    assert bool(jnp.isfinite(out["loss"]))
    # match the pure-JAX reference (loose tol: matmul pass-precision differs)
    assert bool(jnp.all(jnp.abs(out["logits"] - logits_ref) < 1e-2))
    assert bool(jnp.all(jnp.abs(out["prob"] - prob_ref) < 1e-2))
    assert bool(abs(float(out["loss"]) - float(loss_ref)) < 1e-2)
    print("KERNEL_OK")
</pallas_src>

<mosaic_0001>
module attributes {stable_mosaic.version = 11 : i64} {
  func.func @classify_head_kernel(%arg0: memref<2xi32, #tpu.memory_space<smem>>, %arg1: memref<16x32xf32, #tpu.memory_space<vmem>>, %arg2: memref<16x1xf32, #tpu.memory_space<vmem>>, %arg3: memref<34x128xf32, #tpu.memory_space<vmem>>, %arg4: memref<2x8x128xf32, #tpu.memory_space<vmem>>, %arg5: memref<2x128xf32, #tpu.memory_space<vmem>>) attributes {dimension_semantics = [], scalar_prefetch = 0 : i64, scratch_operands = 0 : i64, tpu.core_type = #tpu.core_type<tc>} {
    %c0 = arith.constant 0 : index
    %c0_0 = arith.constant 0 : index
    %0 = vector.load %arg1[%c0, %c0_0] : memref<16x32xf32, #tpu.memory_space<vmem>>, vector<16x32xf32>
    %c0_1 = arith.constant 0 : index
    %c0_2 = arith.constant 0 : index
    %1 = vector.load %arg2[%c0_1, %c0_2] : memref<16x1xf32, #tpu.memory_space<vmem>>, vector<16x1xf32>
    %2 = vector.broadcast %1 : vector<16x1xf32> to vector<16x32xf32>
    %3 = arith.mulf %0, %2 : vector<16x32xf32>
    %c0_3 = arith.constant 0 : index
    %c0_4 = arith.constant 0 : index
    %4 = vector.load %arg3[%c0_3, %c0_4] : memref<34x128xf32, #tpu.memory_space<vmem>>, vector<34x128xf32>
    %5 = vector.extract_strided_slice %4 {offsets = [0, 0], sizes = [32, 128], strides = [1, 1]} : vector<34x128xf32> to vector<32x128xf32>
    %6 = vector.extract_strided_slice %4 {offsets = [32, 0], sizes = [1, 128], strides = [1, 1]} : vector<34x128xf32> to vector<1x128xf32>
    %7 = vector.extract_strided_slice %4 {offsets = [33, 0], sizes = [1, 2], strides = [1, 1]} : vector<34x128xf32> to vector<1x2xf32>
    %cst = arith.constant dense<0.000000e+00> : vector<16x128xf32>
    %8 = tpu.matmul %3, %5, %cst {dimension_numbers = #tpu.dot_dimension_numbers<[1], [0], [0], [1], [0, 0, 1, 1], [], []>} : vector<16x32xf32>, vector<32x128xf32>, vector<16x128xf32> -> vector<16x128xf32>
    %9 = vector.broadcast %6 : vector<1x128xf32> to vector<16x128xf32>
    %10 = arith.addf %8, %9 : vector<16x128xf32>
    %cst_5 = arith.constant 0.000000e+00 : f32
    %11 = vector.broadcast %cst_5 : f32 to vector<16x128xf32>
    %12 = arith.maximumf %10, %11 : vector<16x128xf32>
    %13 = vector.shape_cast %12 : vector<16x128xf32> to vector<2x8x128xf32>
    %c0_6 = arith.constant 0 : index
    %c0_7 = arith.constant 0 : index
    %c0_8 = arith.constant 0 : index
    %14 = vector.load %arg4[%c0_6, %c0_7, %c0_8] : memref<2x8x128xf32, #tpu.memory_space<vmem>>, vector<2x8x128xf32>
    %15 = vector.extract_strided_slice %14 {offsets = [0, 0, 0], sizes = [1, 8, 128], strides = [1, 1, 1]} : vector<2x8x128xf32> to vector<1x8x128xf32>
    %16 = vector.shape_cast %15 : vector<1x8x128xf32> to vector<8x128xf32>
    %17 = vector.shape_cast %16 : vector<8x128xf32> to vector<1x8x128xf32>
    %18 = vector.broadcast %17 : vector<1x8x128xf32> to vector<2x8x128xf32>
    %19 = arith.mulf %13, %18 : vector<2x8x128xf32>
    %cst_9 = arith.constant dense<0.000000e+00> : vector<2x8xf32>
    %20 = vector.multi_reduction <add>, %19, %cst_9 [2] : vector<2x8x128xf32> to vector<2x8xf32>
    %21 = vector.shape_cast %20 : vector<2x8xf32> to vector<2x8x1xf32>
    %22 = vector.extract_strided_slice %14 {offsets = [1, 0, 0], sizes = [1, 8, 128], strides = [1, 1, 1]} : vector<2x8x128xf32> to vector<1x8x128xf32>
    %23 = vector.shape_cast %22 : vector<1x8x128xf32> to vector<8x128xf32>
    %24 = vector.shape_cast %23 : vector<8x128xf32> to vector<1x8x128xf32>
    %25 = vector.broadcast %24 : vector<1x8x128xf32> to vector<2x8x128xf32>
    %26 = arith.mulf %13, %25 : vector<2x8x128xf32>
    %cst_10 = arith.constant dense<0.000000e+00> : vector<2x8xf32>
    %27 = vector.multi_reduction <add>, %26, %cst_10 [2] : vector<2x8x128xf32> to vector<2x8xf32>
    %28 = vector.shape_cast %27 : vector<2x8xf32> to vector<2x8x1xf32>
    %29 = tpu.concatenate %21, %28 in 2 : vector<2x8x1xf32>, vector<2x8x1xf32> -> vector<2x8x2xf32>
    %cst_11 = arith.constant dense<0.000000e+00> : vector<2x2xf32>
    %30 = vector.multi_reduction <add>, %29, %cst_11 [1] : vector<2x8x2xf32> to vector<2x2xf32>
    %31 = vector.broadcast %7 : vector<1x2xf32> to vector<2x2xf32>
    %32 = arith.addf %30, %31 : vector<2x2xf32>
    %cst_12 = arith.constant dense<0xFF800000> : vector<2xf32>
    %33 = vector.multi_reduction <maximumf>, %32, %cst_12 [1] : vector<2x2xf32> to vector<2xf32>
    %34 = vector.shape_cast %33 : vector<2xf32> to vector<2x1xf32>
    %35 = vector.broadcast %34 : vector<2x1xf32> to vector<2x2xf32>
    %36 = arith.subf %32, %35 : vector<2x2xf32>
    %37 = math.exp %36 : vector<2x2xf32>
    %cst_13 = arith.constant dense<0.000000e+00> : vector<2xf32>
    %38 = vector.multi_reduction <add>, %37, %cst_13 [1] : vector<2x2xf32> to vector<2xf32>
    %39 = vector.shape_cast %38 : vector<2xf32> to vector<2x1xf32>
    %40 = vector.broadcast %39 : vector<2x1xf32> to vector<2x2xf32>
    %41 = arith.divf %37, %40 : vector<2x2xf32>
    %42 = math.log %39 : vector<2x1xf32>
    %43 = vector.broadcast %42 : vector<2x1xf32> to vector<2x2xf32>
    %44 = arith.subf %36, %43 : vector<2x2xf32>
    %45 = tpu.iota {dimensions = array<i32: 1>} : vector<2x2xi32>
    %46 = vector.broadcast %34 : vector<2x1xf32> to vector<2x2xf32>
    %47 = arith.cmpf oeq, %32, %46 : vector<2x2xf32>
    %48 = arith.sitofp %45 : vector<2x2xi32> to vector<2x2xf32>
    %cst_14 = arith.constant 2.000000e+00 : f32
    %49 = vector.broadcast %cst_14 : f32 to vector<2x2xf32>
    %50 = arith.select %47, %48, %49 : vector<2x2xi1>, vector<2x2xf32>
    %cst_15 = arith.constant dense<0x7F800000> : vector<2xf32>
    %51 = vector.multi_reduction <minimumf>, %50, %cst_15 [1] : vector<2x2xf32> to vector<2xf32>
    %52 = vector.shape_cast %51 : vector<2xf32> to vector<2x1xf32>
    %53 = tpu.iota {dimensions = array<i32: 0>} : vector<2x2xi32>
    %c0_i32 = arith.constant 0 : i32
    %54 = vector.broadcast %c0_i32 : i32 to vector<2x2xi32>
    %c0_i32_16 = arith.constant 0 : i32
    %55 = vector.broadcast %c0_i32_16 : i32 to vector<2x2xi32>
    %56 = arith.cmpi eq, %53, %55 : vector<2x2xi32>
    %c0_17 = arith.constant 0 : index
    %57 = memref.load %arg0[%c0_17] : memref<2xi32, #tpu.memory_space<smem>>
    %58 = vector.broadcast %57 : i32 to vector<2x2xi32>
    %59 = arith.select %56, %58, %54 : vector<2x2xi1>, vector<2x2xi32>
    %c1_i32 = arith.constant 1 : i32
    %60 = vector.broadcast %c1_i32 : i32 to vector<2x2xi32>
    %61 = arith.cmpi eq, %53, %60 : vector<2x2xi32>
    %c1 = arith.constant 1 : index
    %62 = memref.load %arg0[%c1] : memref<2xi32, #tpu.memory_space<smem>>
    %63 = vector.broadcast %62 : i32 to vector<2x2xi32>
    %64 = arith.select %61, %63, %59 : vector<2x2xi1>, vector<2x2xi32>
    %65 = arith.cmpi eq, %45, %64 : vector<2x2xi32>
    %cst_18 = arith.constant 0.000000e+00 : f32
    %66 = vector.broadcast %cst_18 : f32 to vector<2x2xf32>
    %67 = arith.select %65, %44, %66 : vector<2x2xi1>, vector<2x2xf32>
    %cst_19 = arith.constant dense<0.000000e+00> : vector<2xf32>
    %68 = vector.multi_reduction <add>, %67, %cst_19 [1] : vector<2x2xf32> to vector<2xf32>
    %69 = vector.shape_cast %68 : vector<2xf32> to vector<2x1xf32>
    %cst_20 = arith.constant 0.000000e+00 : f32
    %70 = vector.broadcast %cst_20 : f32 to vector<2x1xf32>
    %71 = arith.subf %70, %69 : vector<2x1xf32>
    %cst_21 = arith.constant dense<0.000000e+00> : vector<2xf32>
    %72 = vector.multi_reduction <add>, %44, %cst_21 [1] : vector<2x2xf32> to vector<2xf32>
    %73 = vector.shape_cast %72 : vector<2xf32> to vector<2x1xf32>
    %cst_22 = arith.constant 2.000000e+00 : f32
    %74 = vector.broadcast %cst_22 : f32 to vector<2x1xf32>
    %75 = arith.divf %73, %74 : vector<2x1xf32>
    %cst_23 = arith.constant 0.000000e+00 : f32
    %76 = vector.broadcast %cst_23 : f32 to vector<2x1xf32>
    %77 = arith.subf %76, %75 : vector<2x1xf32>
    %cst_24 = arith.constant 0.899999976 : f32
    %78 = vector.broadcast %cst_24 : f32 to vector<2x1xf32>
    %79 = arith.mulf %78, %71 : vector<2x1xf32>
    %cst_25 = arith.constant 1.000000e-01 : f32
    %80 = vector.broadcast %cst_25 : f32 to vector<2x1xf32>
    %81 = arith.mulf %80, %77 : vector<2x1xf32>
    %82 = arith.addf %79, %81 : vector<2x1xf32>
    %cst_26 = arith.constant dense<0.000000e+00> : vector<1xf32>
    %83 = vector.multi_reduction <add>, %82, %cst_26 [0] : vector<2x1xf32> to vector<1xf32>
    %84 = vector.shape_cast %83 : vector<1xf32> to vector<1x1xf32>
    %cst_27 = arith.constant 2.000000e+00 : f32
    %85 = vector.broadcast %cst_27 : f32 to vector<1x1xf32>
    %86 = arith.divf %84, %85 : vector<1x1xf32>
    %cst_28 = arith.constant 0.000000e+00 : f32
    %87 = vector.broadcast %cst_28 : f32 to vector<2x120xf32>
    %88 = vector.shape_cast %86 : vector<1x1xf32> to vector<1x1xf32>
    %89 = vector.broadcast %88 : vector<1x1xf32> to vector<2x1xf32>
    %90 = tpu.concatenate %32, %41, %44, %52, %89, %87 in 1 : vector<2x2xf32>, vector<2x2xf32>, vector<2x2xf32>, vector<2x1xf32>, vector<2x1xf32>, vector<2x120xf32> -> vector<2x128xf32>
    %c0_29 = arith.constant 0 : index
    %c0_30 = arith.constant 0 : index
    %91 = vector.load %arg5[%c0_29, %c0_30] : memref<2x128xf32, #tpu.memory_space<vmem>>, vector<2x128xf32>
    tpu.vector_store %arg5[%c0_29, %c0_30], %90 {strides = array<i32>} : memref<2x128xf32, #tpu.memory_space<vmem>>, vector<2x128xf32>,
    return
  }
}

</mosaic_0001>

<llo_original>
// kernel: classify_head.1
$region0: #{classify_head.1}
  #allocation0 [shape = 'u32[]', space=smem, size = 0x4, offset = 0x4, fixed_abs, tag = 'smem constant byte address 0x4 - core index']
  #allocation1 [shape = 'u32[144,128]{1,0:T(1,128)}', space=vmem, size = 0x12000, scoped, tag = 'internal scratch']
  %s0 = inlined_call_operand.vmem [shape: s32[2], index: 0, kind: input, shape index: {}]
  %s1 = inlined_call_operand.vmem [shape: f32[16,32], index: 1, kind: input, shape index: {}]
  %s2 = inlined_call_operand.vmem [shape: f32[16,1], index: 2, kind: input, shape index: {}]
  %s3 = inlined_call_operand.hbm [shape: f32[34,128], index: 3, kind: input, shape index: {}]
  %s4 = inlined_call_operand.hbm [shape: f32[2,8,128], index: 4, kind: input, shape index: {}]
  %s5 = inlined_call_operand.vmem [shape: f32[2,128], index: 5, kind: output, shape index: {}]
  %s6 = sld [smem:[#allocation0]]
  $region42: #{classify_head.1} parent=0
    _
  %s8 = ssub.s32 1, %s6
  %s9 = scalar_select 0, %s8, %s6
  $region1: #{classify_head.1} parent=0
    #allocation2 [shape = 'u8[512]{0}', space=smem, size = 0x200, scoped, tag = 'input window, operand 0, single buffered']
    #allocation3 [shape = 's32[1]{0}', space=sflag, size = 0x4, scoped, tag = 'scoped memory for classify_head.1']
    #allocation4 [shape = 's32[1]{0}', space=sflag, size = 0x4, scoped, tag = 'scoped memory for classify_head.1']
    #allocation5 [shape = 'u8[20480]{0}', space=vmem, size = 0x5000, scoped, tag = 'input window, operand 3, single buffered']
    #allocation6 [shape = 'u8[8192]{0}', space=vmem, size = 0x2000, scoped, tag = 'input window, operand 4, single buffered']
    #allocation7 [shape = 's32[1]{0}', space=sflag, size = 0x4, scoped, tag = 'scoped memory for classify_head.1']
    %10 = vsyncpa [#allocation4], 0
    %11 = vsyncpa [#allocation3], 0
    %12 = vsyncpa [#allocation7], 0
    // Predicated region
    $region2: #{classify_head.1} parent=1 // pred_check
      _
    $region3: #{classify_head.1} parent=1 // pred_check_branch
      %14 = sbr.rel (0) target = $region5
    $region4: #{classify_head.1} parent=1 // pred_region
      %s16 = ssub.s32 16, 16
      %17 = vsyncadd [#allocation4], %s16
      %s19 = sshll.u32 %s0, 4
      %s20 = int_to_ptr.vmem [resolvable:$true] %s19
      %22 = dma.vmem_to_smem %s20, 16, [#allocation2], [#allocation4]
    $region5: #{classify_head.1} parent=1 // pred_fallthru
      _
    // Predicated region
    $region6: #{classify_head.1} parent=1 // pred_check
      _
    $region7: #{classify_head.1} parent=1 // pred_check_branch
      %24 = sbr.rel (0) target = $region9
    $region8: #{classify_head.1} parent=1 // pred_region
      _
    $region9: #{classify_head.1} parent=1 // pred_fallthru
      _
    // Predicated region
    $region10: #{classify_head.1} parent=1 // pred_check
      _
    $region11: #{classify_head.1} parent=1 // pred_check_branch
      %26 = sbr.rel (0) target = $region13
    $region12: #{classify_head.1} parent=1 // pred_region
      _
    $region13: #{classify_head.1} parent=1 // pred_fallthru
      _
    // Predicated region
    $region14: #{classify_head.1} parent=1 // pred_check
      _
    $region15: #{classify_head.1} parent=1 // pred_check_branch
      %28 = sbr.rel (0) target = $region17
    $region16: #{classify_head.1} parent=1 // pred_region
      %s30 = ssub.s32 640, 640
      %31 = vsyncadd [#allocation3], %s30
      %s32 = sshll.u32 [#allocation5], 4
      %s33 = int_to_ptr.vmem [resolvable:$true] %s32
      %38 = dma.hbm_to_vmem [thread:$0]  %s3, 640, %s33, [#allocation3], 128, 128, 8
    $region17: #{classify_head.1} parent=1 // pred_fallthru
      _
    // Predicated region
    $region18: #{classify_head.1} parent=1 // pred_check
      _
    $region19: #{classify_head.1} parent=1 // pred_check_branch
      %40 = sbr.rel (0) target = $region21
    $region20: #{classify_head.1} parent=1 // pred_region
      %s42 = ssub.s32 256, 256
      %43 = vsyncadd [#allocation7], %s42
      %s44 = sshll.u32 [#allocation6], 4
      %s45 = int_to_ptr.vmem [resolvable:$true] %s44
      %50 = dma.hbm_to_vmem [thread:$0]  %s4, 256, %s45, [#allocation7], 128, 128, 8
    $region21: #{classify_head.1} parent=1 // pred_fallthru
      _
    // Predicated region
    $region22: #{classify_head.1} parent=1 // pred_check
      _
    $region23: #{classify_head.1} parent=1 // pred_check_branch
      %52 = sbr.rel (0) target = $region25
    $region24: #{classify_head.1} parent=1 // pred_region
      %53 = dma.done [#allocation4], 16
    $region25: #{classify_head.1} parent=1 // pred_fallthru
      _
    // Predicated region
    $region26: #{classify_head.1} parent=1 // pred_check
      _
    $region27: #{classify_head.1} parent=1 // pred_check_branch
      %55 = sbr.rel (0) target = $region29
    $region28: #{classify_head.1} parent=1 // pred_region
      %56 = dma.done [#allocation3], 640
    $region29: #{classify_head.1} parent=1 // pred_fallthru
      _
    // Predicated region
    $region30: #{classify_head.1} parent=1 // pred_check
      _
    $region31: #{classify_head.1} parent=1 // pred_check_branch
      %58 = sbr.rel (0) target = $region33
    $region32: #{classify_head.1} parent=1 // pred_region
      %59 = dma.done [#allocation7], 256
    $region33: #{classify_head.1} parent=1 // pred_fallthru
      _
    %60 = sfence
    %v61 = vld [vmem:[%s1] sm:$0xff]
    %v62 = vld [vmem:[%s1 + $0x8] sm:$0xff]
    %v63 = vld [vmem:[%s2] sm:$0xff]
    %v64 = vld [vmem:[%s2 + $0x8] sm:$0xff]
    %66 = vset.pattern.permute.xlu0 0
    %67 = vperm.xlu0 %66, %v63
    %v68 = vpop.permute.xlu0 %67
    %71 = vset.pattern.permute.xlu0 0
    %72 = vperm.xlu0 %71, %v64
    %v73 = vpop.permute.xlu0 %72
    %v75 = vmul.f32 %v61, %v68
    %v76 = vmul.f32 %v62, %v73
    %v77 = vld [vmem:[#allocation5] sm:$0xff]
    %v78 = vld [vmem:[#allocation5 + $0x8] sm:$0xff]
    %v79 = vld [vmem:[#allocation5 + $0x10] sm:$0xff]
    %v80 = vld [vmem:[#allocation5 + $0x18] sm:$0xff]
    %v81 = vld [vmem:[#allocation5 + $0x20] sm:$0x3]
    %v82 = vlaneseq
    %v83 = vshrl.u32 %v82, 7
    %v84 = vsub.s32 0, %v83
    %v85 = vrot.slane %v81, %v84
    %vm86 = vcmask 261120
    %v88 = vsel %vm86, %v75, 0
    %v91 = vsel %vm86, %v76, 0
    %93 = vmatprep.subr.mxu0 0.0
    %94 = vmatpush1.msra.mxu0 0.0
    %95 = vmatprep.subr.mxu0 0.0
    %96 = vmatpush1.msra.mxu0 0.0
    %97 = vmatprep.subr.mxu0 0.0
    %98 = vmatpush1.msra.mxu0 0.0
    %99 = vmatprep.subr.mxu0 0.0
    %100 = vmatpush1.msra.mxu0 0.0
    %101 = vmatprep.subr.mxu0 0.0
    %102 = vmatpush1.msra.mxu0 0.0
    %103 = vmatprep.subr.mxu0 0.0
    %104 = vmatpush1.msra.mxu0 0.0
    %105 = vmatprep.subr.mxu0 0.0
    %106 = vmatpush1.msra.mxu0 0.0
    %107 = vmatprep.subr.mxu0 0.0
    %108 = vmatpush1.msra.mxu0 0.0
    %109 = vmatprep.subr.mxu0 0.0
    %110 = vmatpush1.msra.mxu0 0.0
    %111 = vmatprep.subr.mxu0 0.0
    %112 = vmatpush1.msra.mxu0 0.0
    %113 = vmatprep.subr.mxu0 0.0
    %114 = vmatpush1.msra.mxu0 0.0
    %115 = vmatprep.subr.mxu0 0.0
    %116 = vmatpush1.msra.mxu0 0.0
    %117 = vmatprep.subr.mxu0 0.0
    %118 = vmatpush1.msra.mxu0 %v80
    %119 = vmatprep.subr.mxu0 0.0
    %120 = vmatpush1.msra.mxu0 %v79
    %121 = vmatprep.subr.mxu0 0.0
    %122 = vmatpush1.msra.mxu0 %v78
    %123 = vmatprep.subr.mxu0 0.0
    %124 = vmatpush1.msra.mxu0 %v77
    %125 = vmatprep.subr.mxu0 0.0
    %126 = vmatpush2.msra.mxu0 0.0
    %127 = vmatprep.subr.mxu0 0.0
    %128 = vmatpush2.msra.mxu0 0.0
    %129 = vmatprep.subr.mxu0 0.0
    %130 = vmatpush2.msra.mxu0 0.0
    %131 = vmatprep.subr.mxu0 0.0
    %132 = vmatpush2.msra.mxu0 0.0
    %133 = vmatprep.subr.mxu0 0.0
    %134 = vmatpush2.msra.mxu0 0.0
    %135 = vmatprep.subr.mxu0 0.0
    %136 = vmatpush2.msra.mxu0 0.0
    %137 = vmatprep.subr.mxu0 0.0
    %138 = vmatpush2.msra.mxu0 0.0
    %139 = vmatprep.subr.mxu0 0.0
    %140 = vmatpush2.msra.mxu0 0.0
    %141 = vmatprep.subr.mxu0 0.0
    %142 = vmatpush2.msra.mxu0 0.0
    %143 = vmatprep.subr.mxu0 0.0
    %144 = vmatpush2.msra.mxu0 0.0
    %145 = vmatprep.subr.mxu0 0.0
    %146 = vmatpush2.msra.mxu0 0.0
    %147 = vmatprep.subr.mxu0 0.0
    %148 = vmatpush2.msra.mxu0 0.0
    %149 = vmatprep.subr.mxu0 0.0
    %150 = vmatpush2.msra.mxu0 0.0
    %151 = vmatprep.subr.mxu0 0.0
    %152 = vmatpush2.msra.mxu0 0.0
    %153 = vmatprep.subr.mxu0 0.0
    %154 = vmatpush2.msra.mxu0 0.0
    %155 = vmatprep.subr.mxu0 0.0
    %156 = vmatpush2.msra.mxu0 0.0
    %157 = vmatprep.mubr.f32.mxu0 0.0
    %158 = vmatmul.mubr.f32.gmra.mxu0 %v88
    %v159 = vpop.f32.mrf.mxu0
    %v160 = vadd.f32 %v85, %v159
    %v161 = vpop.f32.mrf.mxu0
    %162 = vmatprep.mubr.f32.mxu0 0.0
    %163 = vmatmul.mubr.f32.gmra.mxu0 %v91
    %v164 = vpop.f32.mrf.mxu0
    %v165 = vadd.f32 %v85, %v164
    %v166 = vpop.f32.mrf.mxu0
    %167 = vdwg.mxu0
    %v168 = vmax.f32 %v160, 0.0
    %v169 = vmax.f32 %v165, 0.0
    %v170 = vld [vmem:[#allocation6] sm:$0xff]
    %v171 = vld [vmem:[#allocation6 + $0x8] sm:$0xff]
    %v172 = vmul.f32 %v168, %v170
    %v173 = vmul.f32 %v169, %v170
    %174 = vadd.xlane.f32.xlu0 %v172
    %v175 = vpop.xlane.xlu0 %174
    %176 = vadd.xlane.f32.xlu0 %v173
    %v177 = vpop.xlane.xlu0 %176
    %v178 = vmul.f32 %v168, %v171
    %v179 = vmul.f32 %v169, %v171
    %180 = vadd.xlane.f32.xlu0 %v178
    %v181 = vpop.xlane.xlu0 %180
    %182 = vadd.xlane.f32.xlu0 %v179
    %v183 = vpop.xlane.xlu0 %182
    %vm184 = vcmask 7168
    %v185 = vsel %vm184, %v175, %v181
    %v186 = vsel %vm184, %v177, %v183
    %vm187 = vcmask 15360
    %v188 = vsel %vm187, %v185, 0.0
    %v189 = vrot.slane %v188, 4
    %v190 = vadd.f32 %v188, %v189
    %v191 = vrot.slane %v190, 2
    %v192 = vadd.f32 %v190, %v191
    %v193 = vrot.slane %v192, 1
    %v194 = vadd.f32 %v192, %v193
    %v195 = vsel %vm187, %v186, 0.0
    %v196 = vrot.slane %v195, 4
    %v197 = vadd.f32 %v195, %v196
    %v198 = vrot.slane %v197, 2
    %v199 = vadd.f32 %v197, %v198
    %v200 = vrot.slane %v199, 1
    %v201 = vadd.f32 %v199, %v200
    %v202 = vlaneseq
    %v203 = vshrl.u32 %v202, 7
    %v204 = vsub.s32 1, %v203
    %v205 = vrot.slane %v81, %v204
    %v206 = vadd.f32 %v194, %v205
    %v207 = vadd.f32 %v201, %v205
    %v210 = vrot.slane %v207, 7
    %vm211 = vcmask 1041409
    %v212 = vsel %vm211, %v210, %v206
    %vm214 = vcmask 9216
    %v215 = vsel %vm214, %v212, -inf
    %216 = vmax.xlane.f32.xlu0 %v215
    %v217 = vpop.xlane.xlu0 %216
    %v219 = vrot.slane %v217, 1
    %v222 = vsub.f32 %v206, %v217
    %v223 = vsub.f32 %v207, %v219
    %v224 = vmul.f32 %v222, 1.442695
    %v225 = vpow.pop %v224
    %v226 = vmul.f32 %v223, 1.442695
    %v227 = vpow.pop %v226
    %v230 = vrot.slane %v227, 7
    %v231 = vsel %vm211, %v230, %v225
    %v233 = vsel %vm214, %v231, 0.0
    %234 = vadd.xlane.f32.xlu0 %v233
    %v235 = vpop.xlane.xlu0 %234
    %v237 = vrot.slane %v235, 1
    %v240 = vrcp.pop %v235
    %v241 = vmul.f32 %v225, %v240
    %v242 = vrcp.pop %v237
    %v243 = vmul.f32 %v227, %v242
    %v244 = vlog2.pop %v235
    %v245 = vmul.f32 %v244, 0.6931472
    %v247 = vrot.slane %v245, 1
    %v250 = vsub.f32 %v222, %v245
    %v251 = vsub.f32 %v223, %v247
    %v252 = vlaneseq
    %v253 = vand.u32 %v252, 127
    %vm254 = vcmp.eq.f32.partialorder %v206, %v217
    %vm255 = vcmp.eq.f32.partialorder %v207, %v219
    %v256 = vcvt.s32.f32 %v253
    %v257 = vsel %vm254, %v256, 2.0
    %v258 = vsel %vm255, %v256, 2.0
    %v261 = vrot.slane %v258, 7
    %v262 = vsel %vm211, %v261, %v257
    %v264 = vsel %vm214, %v262, inf
    %265 = vmin.xlane.f32.xlu0 %v264
    %v266 = vpop.xlane.xlu0 %265
    %v267 = vlaneseq
    %v268 = vshrl.u32 %v267, 7
    %vm269 = vcmp.eq.s32.totalorder %v268, 0
    %s270 = sld [smem:[#allocation2]]
    %v271 = vstv %s270
    %v272 = vsel %vm269, %v271, 0
    %vm273 = vcmp.eq.s32.totalorder %v268, 1
    %s274 = sld [smem:[#allocation2 + $0x1]]
    %v275 = vstv %s274
    %v276 = vsel %vm273, %v275, %v272
    %vm277 = vcmp.eq.s32.totalorder %v253, %v276
    %v280 = vrot.slane %v251, 7
    %v281 = vsel %vm211, %v280, %v250
    %v283 = vsel %vm277, %v281, 0.0
    %v284 = vsel %vm214, %v283, 0.0
    %285 = vadd.xlane.f32.xlu0 %v284
    %v286 = vpop.xlane.xlu0 %285
    %v287 = vsub.f32 0.0, %v286
    %v288 = vsel %vm214, %v281, 0.0
    %289 = vadd.xlane.f32.xlu0 %v288
    %v290 = vpop.xlane.xlu0 %289
    %v291 = vrcp.pop 2.0
    %v292 = vmul.f32 %v290, %v291
    %v293 = vsub.f32 0.0, %v292
    %v294 = vmul.f32 %v287, 0.9
    %v295 = vmul.f32 %v293, 0.1
    %v296 = vadd.f32 %v294, %v295
    %vm297 = vcmask 1041408
    %v298 = vsel %vm297, %v296, 0.0
    %v299 = vrot.slane %v298, 4
    %v300 = vadd.f32 %v298, %v299
    %v301 = vrot.slane %v300, 2
    %v302 = vadd.f32 %v300, %v301
    %v303 = vrot.slane %v302, 1
    %v304 = vadd.f32 %v302, %v303
    %v305 = vmul.f32 %v304, %v291
    %v308 = vrot.slane %v243, 7
    %v309 = vsel %vm211, %v308, %v241
    %310 = vrot.lane.b32.xlu0 %v309, 2
    %v311 = vpop.permute.xlu0 %310
    %313 = vrot.lane.b32.xlu0 %v281, 4
    %v314 = vpop.permute.xlu0 %313
    %v316 = vsel %vm187, %v212, %v311
    %vm317 = vcmask 31744
    %v318 = vsel %vm317, %v316, %v314
    %vm319 = vcmask 48128
    %v320 = vsel %vm319, %v318, %v266
    %vm321 = vcmask 56320
    %v322 = vsel %vm321, %v320, %v305
    %vm323 = vcmask 64512
    %v324 = vsel %vm323, %v322, 0.0
    %325 = vst [vmem:[%s5] sm:$0x3] %v324
    // Predicated region
    $region34: #{classify_head.1} parent=1 // pred_check
      _
    $region35: #{classify_head.1} parent=1 // pred_check_branch
      %327 = sbr.rel (0) target = $region37
    $region36: #{classify_head.1} parent=1 // pred_region
      _
    $region37: #{classify_head.1} parent=1 // pred_fallthru
      _
    // Predicated region
    $region38: #{classify_head.1} parent=1 // pred_check
      _
    $region39: #{classify_head.1} parent=1 // pred_check_branch
      %329 = sbr.rel (0) target = $region41
    $region40: #{classify_head.1} parent=1 // pred_region
      _
    $region41: #{classify_head.1} parent=1 // pred_fallthru
      _
    %330 = vsyncpa [#allocation3], 1
    %331 = vsyncpa [#allocation7], 1
    %332 = vsyncpa [#allocation4], 1

</llo_original>
